<compile_context>
chip_gen: v7x
topology: tpu7x:2x2x1
jax: 0.10.0
libtpu: 0.0.40
codegen_flags: <defaults>
</compile_context>

<pallas_src>
import jax
import jax.numpy as jnp
from jax.experimental import pallas as pl
from jax.experimental.pallas import tpu as pltpu


def _logreg_kernel(wb_ref, x_ref, o_ref):
    # wb_ref: (1, 2) f32 in SMEM holding [w, b]; x_ref/o_ref: (block_rows, lanes) f32 in VMEM.
    w = wb_ref[0, 0]
    b = wb_ref[0, 1]
    z = x_ref[...] * w + b                      # Linear(1, 1): x @ W^T + b  (W is 1x1)
    # Numerically stable, exact sigmoid via EUP tanh: sigmoid(z) = 0.5*tanh(z/2) + 0.5.
    o_ref[...] = 0.5 * jnp.tanh(0.5 * z) + 0.5


def logistic_regression_forward(x, w, b, *, lanes=512, max_block_rows=1024,
                                small_n_threshold=(1 << 18)):
    """x: (N, 1) f32, w: (1, 1) f32, b: (1,) f32 -> (N, 1) f32."""
    n = x.shape[0]
    w_scalar = jnp.asarray(w, jnp.float32).reshape(())
    b_scalar = jnp.asarray(b, jnp.float32).reshape(())

    # Fast path: for small batches the custom-call launch / pad / slice fixed
    # costs dominate and XLA fuses the scalar affine + sigmoid anyway.
    if n < small_n_threshold:
        return jax.nn.sigmoid(x.astype(jnp.float32) * w_scalar + b_scalar)

    # Lane-dense slab: (rows, lanes) f32, last dim a multiple of 128.
    x_flat = x.reshape(-1).astype(jnp.float32)
    rows = -(-n // lanes)                        # ceil(n / lanes)
    padded = rows * lanes
    if padded != n:
        # Tail-only zero pad (only needed when N is not a multiple of `lanes`).
        x_flat = jnp.pad(x_flat, (0, padded - n))
    x2 = x_flat.reshape(rows, lanes)             # metadata-only when padded == n

    # Row-block choice: multiple of 8 (or the full row extent for tiny inputs),
    # capped so a double-buffered in+out footprint stays well under 16 MiB,
    # and split into >= 2 grid steps where possible so v7x's two TensorCores
    # both get work.
    if rows <= 8:
        block_rows = rows                        # single full block (allowed: equals full dim)
    else:
        target = min(max_block_rows, -(-rows // 2))
        block_rows = min(((target + 7) // 8) * 8, max_block_rows)

    grid = (pl.cdiv(rows, block_rows),)          # ragged last block is handled by Pallas

    # Pack [w, b] into a single tiny SMEM parameter block.
    wb = jnp.stack([w_scalar, b_scalar]).reshape(1, 2)

    out = pl.pallas_call(
        _logreg_kernel,
        out_shape=jax.ShapeDtypeStruct((rows, lanes), jnp.float32),
        grid_spec=pltpu.PrefetchScalarGridSpec(
            num_scalar_prefetch=0,
            grid=grid,
            in_specs=[
                pl.BlockSpec((1, 2), lambda i: (0, 0), memory_space=pltpu.SMEM),
                pl.BlockSpec((block_rows, lanes), lambda i: (i, 0)),
            ],
            out_specs=pl.BlockSpec((block_rows, lanes), lambda i: (i, 0)),
        ),
        compiler_params=pltpu.CompilerParams(
            dimension_semantics=("parallel",),
        ),
        cost_estimate=pl.CostEstimate(
            flops=3 * padded, transcendentals=padded, bytes_accessed=8 * padded
        ),
    )(wb, x2)

    if padded == n:
        return out.reshape(n, 1)                 # metadata-only
    return out.reshape(-1)[:n].reshape(n, 1)     # drop the zero-padded tail


if __name__ == "__main__":
    key = jax.random.PRNGKey(0)
    k_x1, k_x2, k_x3, k_w, k_b = jax.random.split(key, 5)

    # PyTorch Linear(1, 1) default init: U(-1/sqrt(fan_in), 1/sqrt(fan_in)), fan_in = 1.
    w = jax.random.uniform(k_w, (1, 1), minval=-1.0, maxval=1.0, dtype=jnp.float32)
    b = jax.random.uniform(k_b, (1,), minval=-1.0, maxval=1.0, dtype=jnp.float32)

    # Case 1: kernel path, N a multiple of `lanes` -> zero-copy slab, 2 grid steps.
    N1 = 8192
    x1 = jax.random.normal(k_x1, (N1, 1), dtype=jnp.float32)
    y1 = jax.block_until_ready(
        logistic_regression_forward(x1, w, b, small_n_threshold=0))
    y1_ref = jax.nn.sigmoid(x1 @ w.T + b)
    assert y1.shape == (N1, 1)
    assert jnp.allclose(y1, y1_ref, atol=1e-5, rtol=1e-5), "kernel path mismatch"

    # Case 2: kernel path with tail padding and a ragged last block.
    N2 = 5000
    x2 = jax.random.normal(k_x2, (N2, 1), dtype=jnp.float32)
    y2 = jax.block_until_ready(
        logistic_regression_forward(x2, w, b, small_n_threshold=0))
    y2_ref = jax.nn.sigmoid(x2 @ w.T + b)
    assert y2.shape == (N2, 1)
    assert jnp.allclose(y2, y2_ref, atol=1e-5, rtol=1e-5), "ragged kernel path mismatch"

    # Case 3: tiny batch takes the plain-JAX fast path (fixed costs dominate).
    N3 = 8
    x3 = jax.random.normal(k_x3, (N3, 1), dtype=jnp.float32)
    y3 = jax.block_until_ready(logistic_regression_forward(x3, w, b))
    y3_ref = jax.nn.sigmoid(x3 @ w.T + b)
    assert y3.shape == (N3, 1)
    assert jnp.allclose(y3, y3_ref, atol=1e-5, rtol=1e-5), "fast path mismatch"

    print("KERNEL_OK")
</pallas_src>

<mosaic_0001>
module attributes {stable_mosaic.version = 11 : i64} {
  func.func @_logreg_kernel(%arg0: i32, %arg1: memref<1x2xf32, #tpu.memory_space<smem>>, %arg2: memref<8x512xf32, #tpu.memory_space<vmem>>, %arg3: memref<8x512xf32, #tpu.memory_space<vmem>>) attributes {dimension_semantics = [#tpu.dimension_semantics<parallel>], iteration_bounds = array<i64: 2>, scalar_prefetch = 0 : i64, scratch_operands = 0 : i64, tpu.core_type = #tpu.core_type<tc>, window_params = [{transform_indices = @transform_0, window_bounds = array<i64: 1, 2>}, {transform_indices = @transform_1, window_bounds = array<i64: 8, 512>}, {transform_indices = @transform_2, window_bounds = array<i64: 8, 512>}]} {
    %c0 = arith.constant 0 : index
    %c0_0 = arith.constant 0 : index
    %0 = memref.load %arg1[%c0, %c0_0] : memref<1x2xf32, #tpu.memory_space<smem>>
    %c0_1 = arith.constant 0 : index
    %c1 = arith.constant 1 : index
    %1 = memref.load %arg1[%c0_1, %c1] : memref<1x2xf32, #tpu.memory_space<smem>>
    %c0_2 = arith.constant 0 : index
    %c0_3 = arith.constant 0 : index
    %2 = vector.load %arg2[%c0_2, %c0_3] : memref<8x512xf32, #tpu.memory_space<vmem>>, vector<8x512xf32>
    %3 = vector.broadcast %0 : f32 to vector<8x512xf32>
    %4 = arith.mulf %2, %3 : vector<8x512xf32>
    %5 = vector.broadcast %1 : f32 to vector<8x512xf32>
    %6 = arith.addf %4, %5 : vector<8x512xf32>
    %cst = arith.constant 5.000000e-01 : f32
    %7 = vector.broadcast %cst : f32 to vector<8x512xf32>
    %8 = arith.mulf %7, %6 : vector<8x512xf32>
    %9 = math.tanh %8 : vector<8x512xf32>
    %cst_4 = arith.constant 5.000000e-01 : f32
    %10 = vector.broadcast %cst_4 : f32 to vector<8x512xf32>
    %11 = arith.mulf %10, %9 : vector<8x512xf32>
    %cst_5 = arith.constant 5.000000e-01 : f32
    %12 = vector.broadcast %cst_5 : f32 to vector<8x512xf32>
    %13 = arith.addf %11, %12 : vector<8x512xf32>
    %c0_6 = arith.constant 0 : index
    %c0_7 = arith.constant 0 : index
    %14 = vector.load %arg3[%c0_6, %c0_7] : memref<8x512xf32, #tpu.memory_space<vmem>>, vector<8x512xf32>
    tpu.vector_store %arg3[%c0_6, %c0_7], %13 {strides = array<i32>} : memref<8x512xf32, #tpu.memory_space<vmem>>, vector<8x512xf32>,
    return
  }
  func.func @transform_0(%arg0: i32) -> (i32, i32) {
    %c0_i32 = arith.constant 0 : i32
    %c0_i32_0 = arith.constant 0 : i32
    %c0_i32_1 = arith.constant 0 : i32
    return %c0_i32, %c0_i32_0 : i32, i32
  }
  func.func @transform_1(%arg0: i32) -> (i32, i32) {
    %c0_i32 = arith.constant 0 : i32
    %c0_i32_0 = arith.constant 0 : i32
    return %arg0, %c0_i32 : i32, i32
  }
  func.func @transform_2(%arg0: i32) -> (i32, i32) {
    %c0_i32 = arith.constant 0 : i32
    %c0_i32_0 = arith.constant 0 : i32
    return %arg0, %c0_i32 : i32, i32
  }
}

</mosaic_0001>

<llo_original>
// kernel: tpu_custom_call.1
$region0: #{tpu_custom_call.1}
  #allocation0 [shape = 'u32[]', space=smem, size = 0x4, offset = 0x4, fixed_abs, tag = 'smem constant byte address 0x4 - core index']
  #allocation1 [shape = 'u32[144,128]{1,0:T(1,128)}', space=vmem, size = 0x12000, scoped, tag = 'internal scratch']
  %s0 = inlined_call_operand.hbm [shape: f32[1,2], index: 0, kind: input, shape index: {}]
  %s1 = inlined_call_operand.hbm [shape: f32[16,512], index: 1, kind: input, shape index: {}]
  %s2 = inlined_call_operand.hbm [shape: f32[16,512], index: 2, kind: output, shape index: {}]
  %s3 = sld [smem:[#allocation0]]
  $region49: #{tpu_custom_call.1} parent=0
    _
  %s5 = ssub.s32 1, %s3
  %s6 = scalar_select 0, %s5, %s3
  $region1: #{tpu_custom_call.1} parent=0
    #allocation2 [shape = 'u8[512]{0}', space=smem, size = 0x200, scoped, tag = 'input window, operand 0, single buffered']
    #allocation3 [shape = 's32[2]{0}', space=sflag, size = 0x8, scoped, tag = 'scoped memory for tpu_custom_call.1']
    #allocation4 [shape = 's32[2]{0}', space=sflag, size = 0x8, scoped, tag = 'scoped memory for tpu_custom_call.1']
    #allocation5 [shape = 's32[2]{0}', space=sflag, size = 0x8, scoped, tag = 'scoped memory for tpu_custom_call.1']
    #allocation6 [shape = 'u8[32768]{0}', space=vmem, size = 0x8000, scoped, tag = 'input window, operand 1']
    #allocation7 [shape = 'u8[32768]{0}', space=vmem, size = 0x8000, scoped, tag = 'output window, operand 0']
    %7 = vsyncpa [#allocation5], 0
    %8 = vsyncpa [#allocation3], 0
    %s9 = scalar_lea.sflag [#allocation3], 1
    %10 = vsyncpa %s9, 0
    %11 = vsyncpa [#allocation4], 0
    %s12 = scalar_lea.sflag [#allocation4], 1
    %13 = vsyncpa %s12, 0
    loop: start=0, step=1, limit=4
    $region2: #{tpu_custom_call.1} parent=1 // loop_pre_header
      _
    $region3: #{tpu_custom_call.1} parent=1 // loop_header
      %s15 = sphi 0, %s19
      %p16 = scmp.ge.s32.totalorder %s15, 4
      %s23 = sphi 0, %s23
      %s25 = sphi 0, %s23
      %s26 = sphi 0, %s25
      %s40 = sphi 0, %s26
      %s46 = sphi 0, %s48
      %s49 = sphi 0, %s46
      %s50 = sphi 0, %s49
      %s66 = sphi 0, %s50
      %s72 = sphi 0, %s74
      %s75 = sphi 0, %s72
      %s76 = sphi 0, %s75
      %s92 = sphi 0, %s76
    $region4: #{tpu_custom_call.1} parent=1 // loop_header_branch
      %18 = sbr.rel (%p16) target = $region8
    $region5: #{tpu_custom_call.1} parent=1 // loop_body
      %s20 = ssub.s32 %s15, 1
      %s21 = ssub.s32 %s15, 2
      %s22 = sadd.s32 %s15, 1
      %s24 = sadd.s32 %s23, 1
      %p27 = scmp.eq.s32.totalorder %s15, 1
      %p28 = scmp.ne.s32.totalorder %s23, %s25
      %p29 = scmp.eq.s32.totalorder %s15, 0
      %p30 = por %p28, %p29
      %p31 = scmp.ne.s32.totalorder %s23, %s25
      %p32 = scmp.eq.s32.totalorder %s20, 1
      %p33 = por %p31, %p32
      %p34 = scmp.ne.s32.totalorder %s25, %s26
      %p35 = scmp.eq.s32.totalorder %s20, 0
      %p36 = por %p34, %p35
      %p37 = scmp.ne.s32.totalorder %s25, %s26
      %p38 = scmp.eq.s32.totalorder %s21, 1
      %p39 = por %p37, %p38
      %p41 = scmp.ne.s32.totalorder %s26, %s40
      %p42 = scmp.eq.s32.totalorder %s21, 0
      %p43 = por %p41, %p42
      %s44 = ssub.s32 %s15, %s22
      %p45 = scmp.eq.s32.totalorder %s44, 0
      %s47 = sadd.s32 %s46, 1
      %s48 = scalar_select %p45, %s46, %s47
      %p51 = pneg %p45
      %p52 = scmp.eq.s32.totalorder %s15, 1
      %p53 = por %p51, %p52
      %p54 = scmp.ne.s32.totalorder %s46, %s49
      %p55 = scmp.eq.s32.totalorder %s15, 0
      %p56 = por %p54, %p55
      %p57 = scmp.ne.s32.totalorder %s46, %s49
      %p58 = scmp.eq.s32.totalorder %s20, 1
      %p59 = por %p57, %p58
      %p60 = scmp.ne.s32.totalorder %s49, %s50
      %p61 = scmp.eq.s32.totalorder %s20, 0
      %p62 = por %p60, %p61
      %p63 = scmp.ne.s32.totalorder %s49, %s50
      %p64 = scmp.eq.s32.totalorder %s21, 1
      %p65 = por %p63, %p64
      %p67 = scmp.ne.s32.totalorder %s50, %s66
      %p68 = scmp.eq.s32.totalorder %s21, 0
      %p69 = por %p67, %p68
      %s70 = ssub.s32 %s15, %s22
      %p71 = scmp.eq.s32.totalorder %s70, 0
      %s73 = sadd.s32 %s72, 1
      %s74 = scalar_select %p71, %s72, %s73
      %p77 = pneg %p71
      %p78 = scmp.eq.s32.totalorder %s15, 1
      %p79 = por %p77, %p78
      %p80 = scmp.ne.s32.totalorder %s72, %s75
      %p81 = scmp.eq.s32.totalorder %s15, 0
      %p82 = por %p80, %p81
      %p83 = scmp.ne.s32.totalorder %s72, %s75
      %p84 = scmp.eq.s32.totalorder %s20, 1
      %p85 = por %p83, %p84
      %p86 = scmp.ne.s32.totalorder %s75, %s76
      %p87 = scmp.eq.s32.totalorder %s20, 0
      %p88 = por %p86, %p87
      %p89 = scmp.ne.s32.totalorder %s75, %s76
      %p90 = scmp.eq.s32.totalorder %s21, 1
      %p91 = por %p89, %p90
      %p93 = scmp.ne.s32.totalorder %s76, %s92
      %p94 = scmp.eq.s32.totalorder %s21, 0
      %p95 = por %p93, %p94
      %p96 = scmp.le.s32.totalorder 1, %s15
      %p97 = scmp.lt.s32.totalorder %s15, 3
      %p98 = pnand %p96, %p97
      %p99 = pneg %p98
      // Predicated region
      $region9: #{tpu_custom_call.1} parent=5 // pred_check
        _
      $region10: #{tpu_custom_call.1} parent=5 // pred_check_branch
        %101 = sbr.rel (%p98) target = $region12
      $region11: #{tpu_custom_call.1} parent=5 // pred_region
        %s102 = ssub.s32 %s15, 1
        // Predicated region
        $region13: #{tpu_custom_call.1} parent=11 // pred_check
          %p103 = pneg %p36
        $region14: #{tpu_custom_call.1} parent=11 // pred_check_branch
          %105 = sbr.rel (%p103) target = $region16
        $region15: #{tpu_custom_call.1} parent=11 // pred_region
          %s107 = ssub.s32 16, 16
          %108 = vsyncadd [#allocation5], %s107
          %111 = dma.hbm_to_smem %s0, 16, [#allocation2], [#allocation5]
        $region16: #{tpu_custom_call.1} parent=11 // pred_fallthru
          _
      $region12: #{tpu_custom_call.1} parent=5 // pred_fallthru
        _
      %p112 = scmp.lt.s32.totalorder %s15, 2
      // Predicated region
      $region17: #{tpu_custom_call.1} parent=5 // pred_check
        %p113 = pneg %p112
      $region18: #{tpu_custom_call.1} parent=5 // pred_check_branch
        %115 = sbr.rel (%p113) target = $region20
      $region19: #{tpu_custom_call.1} parent=5 // pred_region
        // Predicated region
        $region21: #{tpu_custom_call.1} parent=19 // pred_check
          %p116 = pneg %p56
        $region22: #{tpu_custom_call.1} parent=19 // pred_check_branch
          %118 = sbr.rel (%p116) target = $region24
        $region23: #{tpu_custom_call.1} parent=19 // pred_region
          %s119 = sand.u32 %s46, 1
          %s120 = scalar_lea.sflag [#allocation3], %s119
          %s121 = sand.u32 %s46, 1
          %s122 = smul.addr %s121, 32
          %s123 = scalar_lea.vmem [#allocation6], %s122
          %s125 = ssub.s32 512, 512
          %126 = vsyncadd %s120, %s125
          %s127 = smul.addr %s15, 4
          %s128 = smul.addr %s127, 128
          %s129 = scalar_lea.hbm %s1, %s128
          %s131 = sshll.u32 %s123, 4
          %s132 = int_to_ptr.vmem [resolvable:$true] %s131
          %134 = dma.hbm_to_vmem [thread:$0]  %s129, 512, %s132, %s120
        $region24: #{tpu_custom_call.1} parent=19 // pred_fallthru
          _
      $region20: #{tpu_custom_call.1} parent=5 // pred_fallthru
        _
      %p135 = scmp.le.s32.totalorder 1, %s15
      %p136 = scmp.lt.s32.totalorder %s15, 3
      %p137 = pnand %p135, %p136
      %p138 = pneg %p137
      // Predicated region
      $region25: #{tpu_custom_call.1} parent=5 // pred_check
        _
      $region26: #{tpu_custom_call.1} parent=5 // pred_check_branch
        %140 = sbr.rel (%p137) target = $region28
      $region27: #{tpu_custom_call.1} parent=5 // pred_region
        %s141 = ssub.s32 %s15, 1
        // Predicated region
        $region29: #{tpu_custom_call.1} parent=27 // pred_check
          %p142 = pneg %p36
        $region30: #{tpu_custom_call.1} parent=27 // pred_check_branch
          %144 = sbr.rel (%p142) target = $region32
        $region31: #{tpu_custom_call.1} parent=27 // pred_region
          %145 = dma.done [#allocation5], 16
        $region32: #{tpu_custom_call.1} parent=27 // pred_fallthru
          _
        %s146 = sand.u32 %s49, 1
        %s147 = scalar_lea.sflag [#allocation3], %s146
        %s148 = sand.u32 %s49, 1
        %s149 = smul.addr %s148, 32
        %s150 = scalar_lea.vmem [#allocation6], %s149
        // Predicated region
        $region33: #{tpu_custom_call.1} parent=27 // pred_check
          %p151 = pneg %p62
        $region34: #{tpu_custom_call.1} parent=27 // pred_check_branch
          %153 = sbr.rel (%p151) target = $region36
        $region35: #{tpu_custom_call.1} parent=27 // pred_region
          %154 = dma.done %s147, 512
        $region36: #{tpu_custom_call.1} parent=27 // pred_fallthru
          _
        %155 = sfence
        %p156 = pneg %p36
        %p157 = pneg %p33
        %s158 = sand.u32 %s49, 1
        %s159 = scalar_lea.sflag [#allocation3], %s158
        %s160 = sand.u32 %s49, 1
        %s161 = smul.addr %s160, 32
        %s162 = scalar_lea.vmem [#allocation6], %s161
        %p163 = pneg %p62
        %p164 = pneg %p59
        %p165 = pneg %p88
        %p166 = pneg %p85
        %s167 = sand.u32 %s75, 1
        %s168 = scalar_lea.sflag [#allocation4], %s167
        %s169 = sand.u32 %s75, 1
        %s170 = smul.addr %s169, 32
        %s171 = scalar_lea.vmem [#allocation7], %s170
        %s172 = sld [smem:[#allocation2]]
        %s173 = sld [smem:[#allocation2 + $0x1]]
        %v174 = vld [vmem:[%s150] sm:$0xff]
        %v175 = vld [vmem:[%s150 + $0x8] sm:$0xff]
        %v176 = vld [vmem:[%s150 + $0x10] sm:$0xff]
        %v177 = vld [vmem:[%s150 + $0x18] sm:$0xff]
        %v178 = vstv %s172
        %v179 = vmul.f32 %v174, %v178
        %v180 = vmul.f32 %v175, %v178
        %v181 = vmul.f32 %v176, %v178
        %v182 = vmul.f32 %v177, %v178
        %v183 = vstv %s173
        %v184 = vadd.f32 %v179, %v183
        %v185 = vadd.f32 %v180, %v183
        %v186 = vadd.f32 %v181, %v183
        %v187 = vadd.f32 %v182, %v183
        %v188 = vmul.f32 %v184, 0.5
        %v189 = vmul.f32 %v185, 0.5
        %v190 = vmul.f32 %v186, 0.5
        %v191 = vmul.f32 %v187, 0.5
        %v192 = vtanh.pop %v188
        %v193 = vtanh.pop %v189
        %v194 = vtanh.pop %v190
        %v195 = vtanh.pop %v191
        %v196 = vmul.f32 %v192, 0.5
        %v197 = vmul.f32 %v193, 0.5
        %v198 = vmul.f32 %v194, 0.5
        %v199 = vmul.f32 %v195, 0.5
        %v200 = vadd.f32 %v196, 0.5
        %v201 = vadd.f32 %v197, 0.5
        %v202 = vadd.f32 %v198, 0.5
        %v203 = vadd.f32 %v199, 0.5
        %204 = vst [vmem:[%s171] sm:$0xff] %v200
        %205 = vst [vmem:[%s171 + $0x8] sm:$0xff] %v201
        %206 = vst [vmem:[%s171 + $0x10] sm:$0xff] %v202
        %207 = vst [vmem:[%s171 + $0x18] sm:$0xff] %v203
        %s208 = sand.u32 %s75, 1
        %s209 = scalar_lea.sflag [#allocation4], %s208
        %s210 = sand.u32 %s75, 1
        %s211 = smul.addr %s210, 32
        %s212 = scalar_lea.vmem [#allocation7], %s211
        // Predicated region
        $region37: #{tpu_custom_call.1} parent=27 // pred_check
          %p213 = pneg %p85
        $region38: #{tpu_custom_call.1} parent=27 // pred_check_branch
          %215 = sbr.rel (%p213) target = $region40
        $region39: #{tpu_custom_call.1} parent=27 // pred_region
          %s217 = ssub.s32 512, 512
          %218 = vsyncadd %s209, %s217
          %s219 = smul.addr %s20, 4
          %s220 = smul.addr %s219, 128
          %s221 = scalar_lea.hbm %s2, %s220
          %s223 = sshll.u32 %s212, 4
          %s224 = int_to_ptr.vmem [resolvable:$true] %s223
          %226 = dma.vmem_to_hbm [thread:$0]  %s224, 512, %s221, %s209
        $region40: #{tpu_custom_call.1} parent=27 // pred_fallthru
          _
      $region28: #{tpu_custom_call.1} parent=5 // pred_fallthru
        _
      %p227 = scmp.le.s32.totalorder 2, %s15
      // Predicated region
      $region41: #{tpu_custom_call.1} parent=5 // pred_check
        %p228 = pneg %p227
      $region42: #{tpu_custom_call.1} parent=5 // pred_check_branch
        %230 = sbr.rel (%p228) target = $region44
      $region43: #{tpu_custom_call.1} parent=5 // pred_region
        %s231 = ssub.s32 %s15, 2
        // Predicated region
        $region45: #{tpu_custom_call.1} parent=43 // pred_check
          %p232 = pneg %p91
        $region46: #{tpu_custom_call.1} parent=43 // pred_check_branch
          %234 = sbr.rel (%p232) target = $region48
        $region47: #{tpu_custom_call.1} parent=43 // pred_region
          %s235 = sand.u32 %s76, 1
          %s236 = scalar_lea.sflag [#allocation4], %s235
          %s237 = sand.u32 %s76, 1
          %s238 = smul.addr %s237, 32
          %s239 = scalar_lea.vmem [#allocation7], %s238
          %240 = dma.done %s236, 512
        $region48: #{tpu_custom_call.1} parent=43 // pred_fallthru
          _
      $region44: #{tpu_custom_call.1} parent=5 // pred_fallthru
        _
    $region6: #{tpu_custom_call.1} parent=1 // loop_footer
      %s19 = sadd.s32 1, %s15
    $region7: #{tpu_custom_call.1} parent=1 // loop_footer_branch
      %14 = sbr.rel target = $region3
    $region8: #{tpu_custom_call.1} parent=1 // loop_exit
      _
    %241 = vsyncpa [#allocation3], 1
    %s242 = scalar_lea.sflag [#allocation3], 1
    %243 = vsyncpa %s242, 1
    %244 = vsyncpa [#allocation4], 1
    %s245 = scalar_lea.sflag [#allocation4], 1
    %246 = vsyncpa %s245, 1
    %247 = vsyncpa [#allocation5], 1
    %s248 = scalar_lea.sflag [#allocation5], 1
    %249 = vsyncpa %s248, 1

</llo_original>
